<compile_context>
chip_gen: v7x
topology: tpu7x:2x2x1
jax: 0.10.0
libtpu: 0.0.40
codegen_flags: <defaults>
</compile_context>

<pallas_src>
from functools import partial

import jax
import jax.numpy as jnp
from jax.experimental import pallas as pl
from jax.experimental.pallas import tpu as pltpu


def _make_attention_kernel(num_heads, head_dim):
    """Per-(batch, head) attention step. Grid = (B, num_heads), heads arbitrary."""

    def kernel(x_ref, wqkv_ref, bqkv_ref, wp_ref, bp_ref, o_ref, acc_ref):
        h = pl.program_id(1)

        @pl.when(h == 0)
        def _():
            acc_ref[...] = jnp.zeros_like(acc_ref)

        # x arrives f32 (half the HBM traffic of a separate wrapper cast pass);
        # cast to bf16 on the VPU for the MXU matmuls.
        x = x_ref[0].astype(jnp.bfloat16)                              # (N, C)

        # Per-head fused [q|k|v] projection. Softmax scale is already folded
        # into the q columns / q bias, so no `* scale` appears below.
        qkv = (jnp.dot(x, wqkv_ref[0], preferred_element_type=jnp.float32)
               + bqkv_ref[0]).astype(jnp.bfloat16)                     # (N, 3*hd)

        q = qkv[:, :head_dim]
        k = qkv[:, head_dim:2 * head_dim]
        v = qkv[:, 2 * head_dim:]

        # q @ k^T without materializing a transposed copy of k.
        s = jax.lax.dot_general(
            q, k, (((1,), (1,)), ((), ())),
            preferred_element_type=jnp.float32)                        # (N, N) f32

        # Softmax in f32; reciprocal rides the EUP slot (approx is fine for
        # inference; use exact reciprocal if this ever backs training).
        s = s - jnp.max(s, axis=-1, keepdims=True)
        p = jnp.exp(s)
        p = p * pl.reciprocal(jnp.sum(p, axis=-1, keepdims=True), approx=True)

        ho = jnp.dot(p.astype(jnp.bfloat16), v,
                     preferred_element_type=jnp.float32)               # (N, hd)

        # This head's slice of the output projection, accumulated in f32.
        acc_ref[...] += jnp.dot(ho.astype(jnp.bfloat16), wp_ref[0],
                                preferred_element_type=jnp.float32)    # (N, C)

        @pl.when(h == num_heads - 1)
        def _():
            # Keep f32 output to match the PyTorch module's dtype.
            o_ref[0] = (acc_ref[...] + bp_ref[...]).astype(o_ref.dtype)

    return kernel


@partial(jax.jit, static_argnames=("num_heads",))
def attention_pallas(x, Wq, bq, Wkv, bkv, Wp, bp, num_heads):
    """Matches PyTorch Attention.forward. x: (B, N, C) f32.

    Weights in PyTorch nn.Linear layout (out_features, in_features); biases 1-D.
    """
    B, N, C = x.shape
    hd = C // num_heads
    scale = hd ** (-0.5)

    # ---- glue (runs once under jit): head-major, MXU-friendly layouts -------
    # Per-head [q|k|v] slabs; the softmax scale is folded into q weight + bias.
    WqT = (Wq.T * scale).reshape(C, num_heads, hd).transpose(1, 0, 2)    # (H, C, hd)
    WkT = Wkv[:C].T.reshape(C, num_heads, hd).transpose(1, 0, 2)         # (H, C, hd)
    WvT = Wkv[C:].T.reshape(C, num_heads, hd).transpose(1, 0, 2)         # (H, C, hd)
    Wqkv_h = jnp.concatenate([WqT, WkT, WvT], axis=-1).astype(jnp.bfloat16)  # (H, C, 3hd)

    bq_h = (bq * scale).reshape(num_heads, 1, hd)
    bk_h = bkv[:C].reshape(num_heads, 1, hd)
    bv_h = bkv[C:].reshape(num_heads, 1, hd)
    bqkv_h = jnp.concatenate([bq_h, bk_h, bv_h], axis=-1).astype(jnp.float32)  # (H, 1, 3hd)

    Wp_h = Wp.T.reshape(num_heads, hd, C).astype(jnp.bfloat16)           # (H, hd, C)
    bp2 = bp.reshape(1, C).astype(jnp.float32)                           # (1, C)

    kernel = _make_attention_kernel(num_heads, hd)

    # Explicit scoped-VMEM budget (v5e default is only 16 MiB of 128): rough
    # block + intermediate footprint with generous headroom, clamped so it is
    # valid on every generation (v7x physical VMEM is 64 MiB per TC).
    raw_bytes = (
        N * C * 4                      # x block (f32)
        + 2 * C * 3 * hd * 2           # Wqkv head slab, double-buffered bf16
        + 2 * 3 * hd * 4               # bqkv head slab
        + 2 * hd * C * 2               # Wp head slab
        + C * 4                        # bp
        + N * C * 4                    # output block (f32)
        + N * C * 4                    # acc scratch (f32)
        + 2 * N * N * 4 + N * 3 * hd * 4   # live intermediates (scores, p, qkv)
    )
    vmem_limit = int(min(max(4 * raw_bytes, 16 * 1024 * 1024), 48 * 1024 * 1024))

    out = pl.pallas_call(
        kernel,
        out_shape=jax.ShapeDtypeStruct((B, N, C), x.dtype),
        grid_spec=pltpu.PrefetchScalarGridSpec(
            num_scalar_prefetch=0,
            grid=(B, num_heads),
            in_specs=[
                pl.BlockSpec((1, N, C), lambda b, h: (b, 0, 0)),        # x (f32, resident over h)
                pl.BlockSpec((1, C, 3 * hd), lambda b, h: (h, 0, 0)),   # per-head Wqkv (bf16)
                pl.BlockSpec((1, 1, 3 * hd), lambda b, h: (h, 0, 0)),   # per-head bqkv (f32)
                pl.BlockSpec((1, hd, C), lambda b, h: (h, 0, 0)),       # per-head Wp (bf16)
                pl.BlockSpec((1, C), lambda b, h: (0, 0)),              # bp (f32)
            ],
            out_specs=pl.BlockSpec((1, N, C), lambda b, h: (b, 0, 0)),
            scratch_shapes=[pltpu.VMEM((N, C), jnp.float32)],           # per-batch accumulator
        ),
        compiler_params=pltpu.CompilerParams(
            dimension_semantics=("parallel", "arbitrary"),
            vmem_limit_bytes=vmem_limit,
        ),
    )(x, Wqkv_h, bqkv_h, Wp_h, bp2)
    return out


def attention_ref(x, Wq, bq, Wkv, bkv, Wp, bp, num_heads):
    """Pure-JAX f32 reference mirroring the PyTorch forward exactly."""
    B, N, C = x.shape
    hd = C // num_heads
    q = (x @ Wq.T + bq).reshape(B, N, num_heads, hd).transpose(0, 2, 1, 3)
    kv = (x @ Wkv.T + bkv).reshape(B, N, 2, num_heads, hd).transpose(2, 0, 3, 1, 4)
    k, v = kv[0], kv[1]
    attn = (q @ jnp.swapaxes(k, -2, -1)) * (hd ** (-0.5))
    attn = jax.nn.softmax(attn, axis=-1)
    out = (attn @ v).transpose(0, 2, 1, 3).reshape(B, N, C)
    return out @ Wp.T + bp


if __name__ == "__main__":
    # Small shapes consistent with the module: x of shape (B, N, C), N = H*W.
    B, H, W, C = 2, 4, 4, 32
    N = H * W
    num_heads = 4

    key = jax.random.PRNGKey(0)
    kx, kq, kkv, kp = jax.random.split(key, 4)

    x = jax.random.normal(kx, (B, N, C), dtype=jnp.float32)

    # trunc_normal(std=0.02)-style init, zero biases, PyTorch nn.Linear layout.
    Wq = 0.02 * jax.random.truncated_normal(kq, -2.0, 2.0, (C, C), jnp.float32)
    bq = jnp.zeros((C,), jnp.float32)
    Wkv = 0.02 * jax.random.truncated_normal(kkv, -2.0, 2.0, (2 * C, C), jnp.float32)
    bkv = jnp.zeros((2 * C,), jnp.float32)
    Wp = 0.02 * jax.random.truncated_normal(kp, -2.0, 2.0, (C, C), jnp.float32)
    bp = jnp.zeros((C,), jnp.float32)

    out = attention_pallas(x, Wq, bq, Wkv, bkv, Wp, bp, num_heads)
    out = jax.block_until_ready(out)

    ref = attention_ref(x, Wq, bq, Wkv, bkv, Wp, bp, num_heads)
    assert out.shape == (B, N, C)
    # bf16 matmul operands + approx reciprocal -> loosened tolerance vs f32 ref.
    assert jnp.allclose(out, ref, atol=2e-2, rtol=2e-2), "mismatch vs reference"

    print("KERNEL_OK")
</pallas_src>

<mosaic_0001>
module attributes {stable_mosaic.version = 11 : i64} {
  func.func @kernel(%arg0: i32, %arg1: i32, %arg2: memref<1x16x32xf32, #tpu.memory_space<vmem>>, %arg3: memref<1x32x24xbf16, #tpu.memory_space<vmem>>, %arg4: memref<1x1x24xf32, #tpu.memory_space<vmem>>, %arg5: memref<1x8x32xbf16, #tpu.memory_space<vmem>>, %arg6: memref<1x32xf32, #tpu.memory_space<vmem>>, %arg7: memref<1x16x32xf32, #tpu.memory_space<vmem>>, %arg8: memref<16x32xf32, #tpu.memory_space<vmem>>) attributes {dimension_semantics = [#tpu.dimension_semantics<parallel>, #tpu.dimension_semantics<arbitrary>], iteration_bounds = array<i64: 2, 4>, scalar_prefetch = 0 : i64, scratch_operands = 1 : i64, tpu.core_type = #tpu.core_type<tc>, window_params = [{transform_indices = @transform_0, window_bounds = array<i64: 1, 16, 32>}, {transform_indices = @transform_1, window_bounds = array<i64: 1, 32, 24>}, {transform_indices = @transform_2, window_bounds = array<i64: 1, 1, 24>}, {transform_indices = @transform_3, window_bounds = array<i64: 1, 8, 32>}, {pipeline_mode = #tpu.pipeline_mode<synchronous>, transform_indices = @transform_4, window_bounds = array<i64: 1, 32>}, {transform_indices = @transform_5, window_bounds = array<i64: 1, 16, 32>}]} {
    %c0_i32 = arith.constant 0 : i32
    %0 = arith.cmpi eq, %arg1, %c0_i32 : i32
    %1 = arith.extui %0 : i1 to i32
    %c0_i32_0 = arith.constant 0 : i32
    %2 = arith.cmpi ne, %1, %c0_i32_0 : i32
    scf.if %2 {
      %cst_22 = arith.constant 0.000000e+00 : f32
      %40 = vector.broadcast %cst_22 : f32 to vector<16x32xf32>
      %c0_23 = arith.constant 0 : index
      %c0_24 = arith.constant 0 : index
      %41 = vector.load %arg8[%c0_23, %c0_24] : memref<16x32xf32, #tpu.memory_space<vmem>>, vector<16x32xf32>
      tpu.vector_store %arg8[%c0_23, %c0_24], %40 {strides = array<i32>} : memref<16x32xf32, #tpu.memory_space<vmem>>, vector<16x32xf32>,
    } else {
    }
    %c0 = arith.constant 0 : index
    %c0_1 = arith.constant 0 : index
    %c0_2 = arith.constant 0 : index
    %3 = vector.load %arg2[%c0, %c0_1, %c0_2] : memref<1x16x32xf32, #tpu.memory_space<vmem>>, vector<1x16x32xf32>
    %4 = vector.shape_cast %3 : vector<1x16x32xf32> to vector<16x32xf32>
    %5 = arith.truncf %4 : vector<16x32xf32> to vector<16x32xbf16>
    %c0_3 = arith.constant 0 : index
    %c0_4 = arith.constant 0 : index
    %c0_5 = arith.constant 0 : index
    %6 = vector.load %arg3[%c0_3, %c0_4, %c0_5] : memref<1x32x24xbf16, #tpu.memory_space<vmem>>, vector<1x32x24xbf16>
    %7 = vector.shape_cast %6 : vector<1x32x24xbf16> to vector<32x24xbf16>
    %cst = arith.constant dense<0.000000e+00> : vector<16x24xf32>
    %8 = tpu.matmul %5, %7, %cst {dimension_numbers = #tpu.dot_dimension_numbers<[1], [0], [0], [1], [0, 0, 1, 1], [], []>} : vector<16x32xbf16>, vector<32x24xbf16>, vector<16x24xf32> -> vector<16x24xf32>
    %c0_6 = arith.constant 0 : index
    %c0_7 = arith.constant 0 : index
    %c0_8 = arith.constant 0 : index
    %9 = vector.load %arg4[%c0_6, %c0_7, %c0_8] : memref<1x1x24xf32, #tpu.memory_space<vmem>>, vector<1x1x24xf32>
    %10 = vector.shape_cast %9 : vector<1x1x24xf32> to vector<1x24xf32>
    %11 = vector.broadcast %10 : vector<1x24xf32> to vector<16x24xf32>
    %12 = arith.addf %8, %11 : vector<16x24xf32>
    %13 = arith.truncf %12 : vector<16x24xf32> to vector<16x24xbf16>
    %14 = vector.extract_strided_slice %13 {offsets = [0, 0], sizes = [16, 8], strides = [1, 1]} : vector<16x24xbf16> to vector<16x8xbf16>
    %15 = vector.extract_strided_slice %13 {offsets = [0, 8], sizes = [16, 8], strides = [1, 1]} : vector<16x24xbf16> to vector<16x8xbf16>
    %16 = vector.extract_strided_slice %13 {offsets = [0, 16], sizes = [16, 8], strides = [1, 1]} : vector<16x24xbf16> to vector<16x8xbf16>
    %cst_9 = arith.constant dense<0.000000e+00> : vector<16x16xf32>
    %17 = tpu.matmul %14, %15, %cst_9 {dimension_numbers = #tpu.dot_dimension_numbers<[1], [1], [0], [0], [0, 0, 1, 0], [], []>} : vector<16x8xbf16>, vector<16x8xbf16>, vector<16x16xf32> -> vector<16x16xf32>
    %cst_10 = arith.constant dense<0xFF800000> : vector<16xf32>
    %18 = vector.multi_reduction <maximumf>, %17, %cst_10 [1] : vector<16x16xf32> to vector<16xf32>
    %19 = vector.shape_cast %18 : vector<16xf32> to vector<16x1xf32>
    %20 = vector.broadcast %19 : vector<16x1xf32> to vector<16x16xf32>
    %21 = arith.subf %17, %20 : vector<16x16xf32>
    %22 = math.exp %21 : vector<16x16xf32>
    %cst_11 = arith.constant dense<0.000000e+00> : vector<16xf32>
    %23 = vector.multi_reduction <add>, %22, %cst_11 [1] : vector<16x16xf32> to vector<16xf32>
    %24 = vector.shape_cast %23 : vector<16xf32> to vector<16x1xf32>
    %25 = tpu.reciprocal %24 {approx = true} : vector<16x1xf32> -> vector<16x1xf32>
    %26 = vector.broadcast %25 : vector<16x1xf32> to vector<16x16xf32>
    %27 = arith.mulf %22, %26 : vector<16x16xf32>
    %28 = arith.truncf %27 : vector<16x16xf32> to vector<16x16xbf16>
    %cst_12 = arith.constant dense<0.000000e+00> : vector<16x8xf32>
    %29 = tpu.matmul %28, %16, %cst_12 {dimension_numbers = #tpu.dot_dimension_numbers<[1], [0], [0], [1], [0, 0, 1, 1], [], []>} : vector<16x16xbf16>, vector<16x8xbf16>, vector<16x8xf32> -> vector<16x8xf32>
    %c0_13 = arith.constant 0 : index
    %c0_14 = arith.constant 0 : index
    %30 = vector.load %arg8[%c0_13, %c0_14] : memref<16x32xf32, #tpu.memory_space<vmem>>, vector<16x32xf32>
    %31 = arith.truncf %29 : vector<16x8xf32> to vector<16x8xbf16>
    %c0_15 = arith.constant 0 : index
    %c0_16 = arith.constant 0 : index
    %c0_17 = arith.constant 0 : index
    %32 = vector.load %arg5[%c0_15, %c0_16, %c0_17] : memref<1x8x32xbf16, #tpu.memory_space<vmem>>, vector<1x8x32xbf16>
    %33 = vector.shape_cast %32 : vector<1x8x32xbf16> to vector<8x32xbf16>
    %cst_18 = arith.constant dense<0.000000e+00> : vector<16x32xf32>
    %34 = tpu.matmul %31, %33, %cst_18 {dimension_numbers = #tpu.dot_dimension_numbers<[1], [0], [0], [1], [0, 0, 1, 1], [], []>} : vector<16x8xbf16>, vector<8x32xbf16>, vector<16x32xf32> -> vector<16x32xf32>
    %35 = arith.addf %30, %34 : vector<16x32xf32>
    %c0_19 = arith.constant 0 : index
    %c0_20 = arith.constant 0 : index
    %36 = vector.load %arg8[%c0_19, %c0_20] : memref<16x32xf32, #tpu.memory_space<vmem>>, vector<16x32xf32>
    tpu.vector_store %arg8[%c0_19, %c0_20], %35 {strides = array<i32>} : memref<16x32xf32, #tpu.memory_space<vmem>>, vector<16x32xf32>,
    %c3_i32 = arith.constant 3 : i32
    %37 = arith.cmpi eq, %arg1, %c3_i32 : i32
    %38 = arith.extui %37 : i1 to i32
    %c0_i32_21 = arith.constant 0 : i32
    %39 = arith.cmpi ne, %38, %c0_i32_21 : i32
    scf.if %39 {
      %c0_22 = arith.constant 0 : index
      %c0_23 = arith.constant 0 : index
      %40 = vector.load %arg8[%c0_22, %c0_23] : memref<16x32xf32, #tpu.memory_space<vmem>>, vector<16x32xf32>
      %c0_24 = arith.constant 0 : index
      %c0_25 = arith.constant 0 : index
      %41 = vector.load %arg6[%c0_24, %c0_25] : memref<1x32xf32, #tpu.memory_space<vmem>>, vector<1x32xf32>
      %42 = vector.broadcast %41 : vector<1x32xf32> to vector<16x32xf32>
      %43 = arith.addf %40, %42 : vector<16x32xf32>
      %c0_26 = arith.constant 0 : index
      %c0_27 = arith.constant 0 : index
      %c0_28 = arith.constant 0 : index
      %44 = vector.load %arg7[%c0_26, %c0_27, %c0_28] : memref<1x16x32xf32, #tpu.memory_space<vmem>>, vector<1x16x32xf32>
      %45 = vector.shape_cast %44 : vector<1x16x32xf32> to vector<16x32xf32>
      %46 = vector.shape_cast %43 : vector<16x32xf32> to vector<1x16x32xf32>
      tpu.vector_store %arg7[%c0_26, %c0_27, %c0_28], %46 {strides = array<i32>} : memref<1x16x32xf32, #tpu.memory_space<vmem>>, vector<1x16x32xf32>,
    } else {
    }
    return
  }
  func.func @transform_0(%arg0: i32, %arg1: i32) -> (i32, i32, i32) {
    %c0_i32 = arith.constant 0 : i32
    %c0_i32_0 = arith.constant 0 : i32
    %c0_i32_1 = arith.constant 0 : i32
    return %arg0, %c0_i32, %c0_i32_0 : i32, i32, i32
  }
  func.func @transform_1(%arg0: i32, %arg1: i32) -> (i32, i32, i32) {
    %c0_i32 = arith.constant 0 : i32
    %c0_i32_0 = arith.constant 0 : i32
    %c0_i32_1 = arith.constant 0 : i32
    return %arg1, %c0_i32, %c0_i32_0 : i32, i32, i32
  }
  func.func @transform_2(%arg0: i32, %arg1: i32) -> (i32, i32, i32) {
    %c0_i32 = arith.constant 0 : i32
    %c0_i32_0 = arith.constant 0 : i32
    %c0_i32_1 = arith.constant 0 : i32
    return %arg1, %c0_i32, %c0_i32_0 : i32, i32, i32
  }
  func.func @transform_3(%arg0: i32, %arg1: i32) -> (i32, i32, i32) {
    %c0_i32 = arith.constant 0 : i32
    %c0_i32_0 = arith.constant 0 : i32
    %c0_i32_1 = arith.constant 0 : i32
    return %arg1, %c0_i32, %c0_i32_0 : i32, i32, i32
  }
  func.func @transform_4(%arg0: i32, %arg1: i32) -> (i32, i32) {
    %c0_i32 = arith.constant 0 : i32
    %c0_i32_0 = arith.constant 0 : i32
    %c0_i32_1 = arith.constant 0 : i32
    return %c0_i32, %c0_i32_0 : i32, i32
  }
  func.func @transform_5(%arg0: i32, %arg1: i32) -> (i32, i32, i32) {
    %c0_i32 = arith.constant 0 : i32
    %c0_i32_0 = arith.constant 0 : i32
    %c0_i32_1 = arith.constant 0 : i32
    return %arg0, %c0_i32, %c0_i32_0 : i32, i32, i32
  }
}

</mosaic_0001>

<llo_original>
// kernel: attention_pallas.1
$region0: #{attention_pallas.1}
  #allocation0 [shape = 'u32[]', space=smem, size = 0x4, offset = 0x4, fixed_abs, tag = 'smem constant byte address 0x4 - core index']
  #allocation1 [shape = 'u32[144,128]{1,0:T(1,128)}', space=vmem, size = 0x12000, scoped, tag = 'internal scratch']
  #allocation2 [shape = 'f32[16,32]{1,0:T(8,128)}', space=vmem, size = 0x2000, scoped, tag = 'scratch operand']
  %s0 = inlined_call_operand.vmem [shape: f32[2,16,32], index: 0, kind: input, shape index: {}]
  %s1 = inlined_call_operand.vmem [shape: bf16[4,32,24], index: 1, kind: input, shape index: {}]
  %s2 = inlined_call_operand.vmem [shape: f32[4,1,24], index: 2, kind: input, shape index: {}]
  %s3 = inlined_call_operand.vmem [shape: bf16[4,8,32], index: 3, kind: input, shape index: {}]
  %s4 = inlined_call_operand.vmem [shape: f32[1,32], index: 4, kind: input, shape index: {}]
  %s5 = inlined_call_operand.hbm [shape: f32[2,16,32], index: 5, kind: output, shape index: {}]
  %s6 = sld [smem:[#allocation0]]
  $region61: #{attention_pallas.1} parent=0
    _
  %s8 = ssub.s32 1, %s6
  %s9 = scalar_select 0, %s8, %s6
  $region1: #{attention_pallas.1} parent=0
    #allocation3 [shape = 'u8[16384]{0}', space=vmem, size = 0x4000, scoped, tag = 'output window, operand 0']
    #allocation4 [shape = 's32[2]{0}', space=sflag, size = 0x8, scoped, tag = 'scoped memory for attention_pallas.1']
    %10 = vsyncpa [#allocation4], 0
    %s11 = scalar_lea.sflag [#allocation4], 1
    %12 = vsyncpa %s11, 0
    loop: start=0, step=1, limit=10
    $region2: #{attention_pallas.1} parent=1 // loop_pre_header
      _
    $region3: #{attention_pallas.1} parent=1 // loop_header
      %s14 = sphi 0, %s18
      %p15 = scmp.ge.s32.totalorder %s14, 10
      %s21 = sphi 0, %s33
      %s22 = sphi 0, %s29
      %s23 = sphi 0, %s21
      %s24 = sphi 0, %s22
      %s25 = sphi 0, %s23
      %s26 = sphi 0, %s24
      %s36 = sphi 0, %s38
      %s39 = sphi 0, %s36
      %s40 = sphi 0, %s39
      %s56 = sphi 0, %s40
      %s62 = sphi 0, %s64
      %s65 = sphi 0, %s62
      %s66 = sphi 0, %s65
      %s82 = sphi 0, %s66
      %s88 = sphi 0, %s90
      %s91 = sphi 0, %s88
      %s92 = sphi 0, %s91
      %s108 = sphi 0, %s92
      %s114 = sphi 0, %s116
      %s117 = sphi 0, %s114
      %s118 = sphi 0, %s117
      %s134 = sphi 0, %s118
      %s138 = sphi 0, %s138
      %s140 = sphi 0, %s138
      %s141 = sphi 0, %s140
      %s155 = sphi 0, %s141
      %s161 = sphi 0, %s163
      %s164 = sphi 0, %s161
      %s165 = sphi 0, %s164
      %s181 = sphi 0, %s165
    $region4: #{attention_pallas.1} parent=1 // loop_header_branch
      %17 = sbr.rel (%p15) target = $region8
    $region5: #{attention_pallas.1} parent=1 // loop_body
      %s19 = ssub.s32 %s14, 1
      %s20 = ssub.s32 %s14, 2
      %s27 = sadd.s32 1, %s22
      %p28 = scmp.ge.s32.totalorder %s27, 4
      %s29 = scalar_select %p28, 0, %s27
      %s30 = sadd.s32 1, %s21
      %s31 = scalar_select %p28, %s30, %s21
      %p32 = scmp.ge.s32.totalorder %s31, 2
      %s33 = scalar_select %p32, 0, %s31
      %s34 = ssub.s32 %s21, %s33
      %p35 = scmp.eq.s32.totalorder %s34, 0
      %s37 = sadd.s32 %s36, 1
      %s38 = scalar_select %p35, %s36, %s37
      %p41 = pneg %p35
      %p42 = scmp.eq.s32.totalorder %s14, 7
      %p43 = por %p41, %p42
      %p44 = scmp.ne.s32.totalorder %s36, %s39
      %p45 = scmp.eq.s32.totalorder %s14, 0
      %p46 = por %p44, %p45
      %p47 = scmp.ne.s32.totalorder %s36, %s39
      %p48 = scmp.eq.s32.totalorder %s19, 7
      %p49 = por %p47, %p48
      %p50 = scmp.ne.s32.totalorder %s39, %s40
      %p51 = scmp.eq.s32.totalorder %s19, 0
      %p52 = por %p50, %p51
      %p53 = scmp.ne.s32.totalorder %s39, %s40
      %p54 = scmp.eq.s32.totalorder %s20, 7
      %p55 = por %p53, %p54
      %p57 = scmp.ne.s32.totalorder %s40, %s56
      %p58 = scmp.eq.s32.totalorder %s20, 0
      %p59 = por %p57, %p58
      %s60 = ssub.s32 %s22, %s29
      %p61 = scmp.eq.s32.totalorder %s60, 0
      %s63 = sadd.s32 %s62, 1
      %s64 = scalar_select %p61, %s62, %s63
      %p67 = pneg %p61
      %p68 = scmp.eq.s32.totalorder %s14, 7
      %p69 = por %p67, %p68
      %p70 = scmp.ne.s32.totalorder %s62, %s65
      %p71 = scmp.eq.s32.totalorder %s14, 0
      %p72 = por %p70, %p71
      %p73 = scmp.ne.s32.totalorder %s62, %s65
      %p74 = scmp.eq.s32.totalorder %s19, 7
      %p75 = por %p73, %p74
      %p76 = scmp.ne.s32.totalorder %s65, %s66
      %p77 = scmp.eq.s32.totalorder %s19, 0
      %p78 = por %p76, %p77
      %p79 = scmp.ne.s32.totalorder %s65, %s66
      %p80 = scmp.eq.s32.totalorder %s20, 7
      %p81 = por %p79, %p80
      %p83 = scmp.ne.s32.totalorder %s66, %s82
      %p84 = scmp.eq.s32.totalorder %s20, 0
      %p85 = por %p83, %p84
      %s86 = ssub.s32 %s22, %s29
      %p87 = scmp.eq.s32.totalorder %s86, 0
      %s89 = sadd.s32 %s88, 1
      %s90 = scalar_select %p87, %s88, %s89
      %p93 = pneg %p87
      %p94 = scmp.eq.s32.totalorder %s14, 7
      %p95 = por %p93, %p94
      %p96 = scmp.ne.s32.totalorder %s88, %s91
      %p97 = scmp.eq.s32.totalorder %s14, 0
      %p98 = por %p96, %p97
      %p99 = scmp.ne.s32.totalorder %s88, %s91
      %p100 = scmp.eq.s32.totalorder %s19, 7
      %p101 = por %p99, %p100
      %p102 = scmp.ne.s32.totalorder %s91, %s92
      %p103 = scmp.eq.s32.totalorder %s19, 0
      %p104 = por %p102, %p103
      %p105 = scmp.ne.s32.totalorder %s91, %s92
      %p106 = scmp.eq.s32.totalorder %s20, 7
      %p107 = por %p105, %p106
      %p109 = scmp.ne.s32.totalorder %s92, %s108
      %p110 = scmp.eq.s32.totalorder %s20, 0
      %p111 = por %p109, %p110
      %s112 = ssub.s32 %s22, %s29
      %p113 = scmp.eq.s32.totalorder %s112, 0
      %s115 = sadd.s32 %s114, 1
      %s116 = scalar_select %p113, %s114, %s115
      %p119 = pneg %p113
      %p120 = scmp.eq.s32.totalorder %s14, 7
      %p121 = por %p119, %p120
      %p122 = scmp.ne.s32.totalorder %s114, %s117
      %p123 = scmp.eq.s32.totalorder %s14, 0
      %p124 = por %p122, %p123
      %p125 = scmp.ne.s32.totalorder %s114, %s117
      %p126 = scmp.eq.s32.totalorder %s19, 7
      %p127 = por %p125, %p126
      %p128 = scmp.ne.s32.totalorder %s117, %s118
      %p129 = scmp.eq.s32.totalorder %s19, 0
      %p130 = por %p128, %p129
      %p131 = scmp.ne.s32.totalorder %s117, %s118
      %p132 = scmp.eq.s32.totalorder %s20, 7
      %p133 = por %p131, %p132
      %p135 = scmp.ne.s32.totalorder %s118, %s134
      %p136 = scmp.eq.s32.totalorder %s20, 0
      %p137 = por %p135, %p136
      %s139 = sadd.s32 %s138, 1
      %p142 = scmp.eq.s32.totalorder %s14, 7
      %p143 = scmp.ne.s32.totalorder %s138, %s140
      %p144 = scmp.eq.s32.totalorder %s14, 0
      %p145 = por %p143, %p144
      %p146 = scmp.ne.s32.totalorder %s138, %s140
      %p147 = scmp.eq.s32.totalorder %s19, 7
      %p148 = por %p146, %p147
      %p149 = scmp.ne.s32.totalorder %s140, %s141
      %p150 = scmp.eq.s32.totalorder %s19, 0
      %p151 = por %p149, %p150
      %p152 = scmp.ne.s32.totalorder %s140, %s141
      %p153 = scmp.eq.s32.totalorder %s20, 7
      %p154 = por %p152, %p153
      %p156 = scmp.ne.s32.totalorder %s141, %s155
      %p157 = scmp.eq.s32.totalorder %s20, 0
      %p158 = por %p156, %p157
      %s159 = ssub.s32 %s21, %s33
      %p160 = scmp.eq.s32.totalorder %s159, 0
      %s162 = sadd.s32 %s161, 1
      %s163 = scalar_select %p160, %s161, %s162
      %p166 = pneg %p160
      %p167 = scmp.eq.s32.totalorder %s14, 7
      %p168 = por %p166, %p167
      %p169 = scmp.ne.s32.totalorder %s161, %s164
      %p170 = scmp.eq.s32.totalorder %s14, 0
      %p171 = por %p169, %p170
      %p172 = scmp.ne.s32.totalorder %s161, %s164
      %p173 = scmp.eq.s32.totalorder %s19, 7
      %p174 = por %p172, %p173
      %p175 = scmp.ne.s32.totalorder %s164, %s165
      %p176 = scmp.eq.s32.totalorder %s19, 0
      %p177 = por %p175, %p176
      %p178 = scmp.ne.s32.totalorder %s164, %s165
      %p179 = scmp.eq.s32.totalorder %s20, 7
      %p180 = por %p178, %p179
      %p182 = scmp.ne.s32.totalorder %s165, %s181
      %p183 = scmp.eq.s32.totalorder %s20, 0
      %p184 = por %p182, %p183
      %p185 = scmp.le.s32.totalorder 1, %s14
      %p186 = scmp.lt.s32.totalorder %s14, 9
      %p187 = pnand %p185, %p186
      %p188 = pneg %p187
      // Predicated region
      $region9: #{attention_pallas.1} parent=5 // pred_check
        _
      $region10: #{attention_pallas.1} parent=5 // pred_check_branch
        %190 = sbr.rel (%p187) target = $region12
      $region11: #{attention_pallas.1} parent=5 // pred_region
        %s191 = ssub.s32 %s14, 1
        // Predicated region
        $region13: #{attention_pallas.1} parent=11 // pred_check
          %p192 = pneg %p151
        $region14: #{attention_pallas.1} parent=11 // pred_check_branch
          %194 = sbr.rel (%p192) target = $region16
        $region15: #{attention_pallas.1} parent=11 // pred_region
          _
        $region16: #{attention_pallas.1} parent=11 // pred_fallthru
          _
      $region12: #{attention_pallas.1} parent=5 // pred_fallthru
        _
      %p195 = scmp.lt.s32.totalorder %s14, 8
      // Predicated region
      $region17: #{attention_pallas.1} parent=5 // pred_check
        %p196 = pneg %p195
      $region18: #{attention_pallas.1} parent=5 // pred_check_branch
        %198 = sbr.rel (%p196) target = $region20
      $region19: #{attention_pallas.1} parent=5 // pred_region
        // Predicated region
        $region21: #{attention_pallas.1} parent=19 // pred_check
          %p199 = pneg %p46
        $region22: #{attention_pallas.1} parent=19 // pred_check_branch
          %201 = sbr.rel (%p199) target = $region24
        $region23: #{attention_pallas.1} parent=19 // pred_region
          %p202 = scmp.lt.s32.totalorder %s21, 1
          %s203 = scalar_select %p202, %s21, 1
          %s204 = smul.addr %s203, 2
          %s205 = smul.addr %s204, 8
          %s206 = scalar_lea.vmem %s0, %s205
        $region24: #{attention_pallas.1} parent=19 // pred_fallthru
          _
        // Predicated region
        $region25: #{attention_pallas.1} parent=19 // pred_check
          %p207 = pneg %p72
        $region26: #{attention_pallas.1} parent=19 // pred_check_branch
          %209 = sbr.rel (%p207) target = $region28
        $region27: #{attention_pallas.1} parent=19 // pred_region
          %p210 = scmp.lt.s32.totalorder %s22, 3
          %s211 = scalar_select %p210, %s22, 3
          %s212 = smul.addr %s211, 4
          %s213 = smul.addr %s212, 4
          %s214 = scalar_lea.vmem %s1, %s213
        $region28: #{attention_pallas.1} parent=19 // pred_fallthru
          _
        // Predicated region
        $region29: #{attention_pallas.1} parent=19 // pred_check
          %p215 = pneg %p98
        $region30: #{attention_pallas.1} parent=19 // pred_check_branch
          %217 = sbr.rel (%p215) target = $region32
        $region31: #{attention_pallas.1} parent=19 // pred_region
          %p218 = scmp.lt.s32.totalorder %s22, 3
          %s219 = scalar_select %p218, %s22, 3
          %s220 = scalar_lea.vmem %s2, %s219
        $region32: #{attention_pallas.1} parent=19 // pred_fallthru
          _
        // Predicated region
        $region33: #{attention_pallas.1} parent=19 // pred_check
          %p221 = pneg %p124
        $region34: #{attention_pallas.1} parent=19 // pred_check_branch
          %223 = sbr.rel (%p221) target = $region36
        $region35: #{attention_pallas.1} parent=19 // pred_region
          %p224 = scmp.lt.s32.totalorder %s22, 3
          %s225 = scalar_select %p224, %s22, 3
          %s226 = smul.addr %s225, 4
          %s227 = scalar_lea.vmem %s3, %s226
        $region36: #{attention_pallas.1} parent=19 // pred_fallthru
          _
      $region20: #{attention_pallas.1} parent=5 // pred_fallthru
        _
      %p228 = scmp.le.s32.totalorder 1, %s14
      %p229 = scmp.lt.s32.totalorder %s14, 9
      %p230 = pnand %p228, %p229
      %p231 = pneg %p230
      // Predicated region
      $region37: #{attention_pallas.1} parent=5 // pred_check
        _
      $region38: #{attention_pallas.1} parent=5 // pred_check_branch
        %233 = sbr.rel (%p230) target = $region40
      $region39: #{attention_pallas.1} parent=5 // pred_region
        %s234 = ssub.s32 %s14, 1
        %p235 = scmp.lt.s32.totalorder %s23, 1
        %s236 = scalar_select %p235, %s23, 1
        %s237 = smul.addr %s236, 2
        %s238 = smul.addr %s237, 8
        %s239 = scalar_lea.vmem %s0, %s238
        %p240 = pneg %p52
        %p241 = pneg %p49
        %p242 = scmp.lt.s32.totalorder %s24, 3
        %s243 = scalar_select %p242, %s24, 3
        %s244 = smul.addr %s243, 4
        %s245 = smul.addr %s244, 4
        %s246 = scalar_lea.vmem %s1, %s245
        %p247 = pneg %p78
        %p248 = pneg %p75
        %p249 = scmp.lt.s32.totalorder %s24, 3
        %s250 = scalar_select %p249, %s24, 3
        %s251 = scalar_lea.vmem %s2, %s250
        %p252 = pneg %p104
        %p253 = pneg %p101
        %p254 = scmp.lt.s32.totalorder %s24, 3
        %s255 = scalar_select %p254, %s24, 3
        %s256 = smul.addr %s255, 4
        %s257 = scalar_lea.vmem %s3, %s256
        %p258 = pneg %p130
        %p259 = pneg %p127
        %p260 = pneg %p151
        %p261 = pneg %p148
        %p262 = pneg %p177
        %p263 = pneg %p174
        %s264 = sand.u32 %s164, 1
        %s265 = scalar_lea.sflag [#allocation4], %s264
        %s266 = sand.u32 %s164, 1
        %s267 = smul.addr %s266, 16
        %s268 = scalar_lea.vmem [#allocation3], %s267
        %p269 = scmp.lt.s32.totalorder %s23, 1
        %s270 = scalar_select %p269, %s23, 1
        %s271 = smul.addr %s270, 2
        %s272 = smul.addr %s271, 8
        %s273 = scalar_lea.vmem %s0, %s272
        %p274 = scmp.lt.s32.totalorder %s24, 3
        %s275 = scalar_select %p274, %s24, 3
        %s276 = smul.addr %s275, 4
        %s277 = smul.addr %s276, 4
        %s278 = scalar_lea.vmem %s1, %s277
        %p279 = scmp.lt.s32.totalorder %s24, 3
        %s280 = scalar_select %p279, %s24, 3
        %s281 = scalar_lea.vmem %s2, %s280
        %p282 = scmp.lt.s32.totalorder %s24, 3
        %s283 = scalar_select %p282, %s24, 3
        %s284 = smul.addr %s283, 4
        %s285 = scalar_lea.vmem %s3, %s284
        %p287 = scmp.eq.s32.totalorder %s24, 0
        // Predicated region
        $region41: #{attention_pallas.1} parent=39 // pred_check
          %p288 = pneg %p287
        $region42: #{attention_pallas.1} parent=39 // pred_check_branch
          %290 = sbr.rel (%p288) target = $region44
        $region43: #{attention_pallas.1} parent=39 // pred_region
          %vm291 = vcmask 261120
          %292 = vst.msk [vmem:[#allocation2] sm:$0xff] %vm291, 0.0
          %293 = vst.msk [vmem:[#allocation2 + $0x8] sm:$0xff] %vm291, 0.0
        $region44: #{attention_pallas.1} parent=39 // pred_fallthru
          _
        %v294 = vld [vmem:[%s273] sm:$0xff]
        %v295 = vld [vmem:[%s273 + $0x8] sm:$0xff]
        %v296 = vpack.c.bf16 %v295, %v294
        %v297 = vld [vmem:[%s278] sm:$0xf]
        %v298 = vld [vmem:[%s278 + $0x4] sm:$0xf]
        %v299 = vld [vmem:[%s278 + $0x8] sm:$0xf]
        %v300 = vld [vmem:[%s278 + $0xc] sm:$0xf]
        %v301 = vld [vmem:[%s281] sm:$0x1]
        %v303 = vlaneseq
        %v304 = vshrl.u32 %v303, 7
        %v305 = vsub.s32 0, %v304
        %v306 = vrot.slane %v301, %v305
        %v312 = vunpack.c.l.b16 %v297
        %v313 = vunpack.c.l.b16 %v298
        %v314 = vunpack.c.l.b16 %v299
        %v315 = vunpack.c.l.b16 %v300
        %v316 = vpack.c.b16 %v313, %v312
        %v317 = vpack.c.b16 %v315, %v314
        %vm320 = vcmask 261120
        %v322 = vsel %vm320, %v296, 0
        %324 = vmatprep.subr.bf16.mxu0 0
        %325 = vmatpush1.bf16.msra.mxu0 %v316
        %326 = vmatprep.subr.bf16.mxu0 0
        %327 = vmatpush1.bf16.msra.mxu0 %v317
        %328 = vmatprep.subr.bf16.mxu0 0
        %329 = vmatpush1.bf16.msra.mxu0 0
        %330 = vmatprep.subr.bf16.mxu0 0
        %331 = vmatpush1.bf16.msra.mxu0 0
        %332 = vmatprep.subr.bf16.mxu0 0
        %333 = vmatpush1.bf16.msra.mxu0 0
        %334 = vmatprep.subr.bf16.mxu0 0
        %335 = vmatpush1.bf16.msra.mxu0 0
        %336 = vmatprep.subr.bf16.mxu0 0
        %337 = vmatpush1.bf16.msra.mxu0 0
        %338 = vmatprep.subr.bf16.mxu0 0
        %339 = vmatpush1.bf16.msra.mxu0 0
        %340 = vmatprep.subr.bf16.mxu0 0
        %341 = vmatpush1.bf16.msra.mxu0 0
        %342 = vmatprep.subr.bf16.mxu0 0
        %343 = vmatpush1.bf16.msra.mxu0 0
        %344 = vmatprep.subr.bf16.mxu0 0
        %345 = vmatpush1.bf16.msra.mxu0 0
        %346 = vmatprep.subr.bf16.mxu0 0
        %347 = vmatpush1.bf16.msra.mxu0 0
        %348 = vmatprep.subr.bf16.mxu0 0
        %349 = vmatpush1.bf16.msra.mxu0 0
        %350 = vmatprep.subr.bf16.mxu0 0
        %351 = vmatpush1.bf16.msra.mxu0 0
        %352 = vmatprep.subr.bf16.mxu0 0
        %353 = vmatpush1.bf16.msra.mxu0 0
        %354 = vmatprep.subr.bf16.mxu0 0
        %355 = vmatpush1.bf16.msra.mxu0 0
        %356 = vmatprep.mubr.bf16.mxu0 0
        %357 = vmatmul.mubr.bf16.gmra.mrb[0].mxu0 %v322
        %v358 = vpop.f32.mrb[0].mxu0
        %v359 = vadd.f32 %v306, %v358
        %v360 = vpop.f32.mrb[0].mxu0
        %v361 = vpop.f32.mrb[0].mxu0
        %v362 = vadd.f32 %v306, %v361
        %v363 = vpop.f32.mrb[0].mxu0
        %364 = vdwg.mxu0
        %v365 = vpack.c.bf16 %v362, %v359
        %367 = vrot.lane.b32.xlu0 %v365, 120
        %v368 = vpop.permute.xlu0 %367
        %vm369 = vcmask 64512
        %v371 = vsel %vm369, %v365, 0
        %v374 = vsel %vm369, %v368, 0
        %376 = vmatprep.subr.bf16.mxu0 0
        %377 = vmatpush1.bf16.xpose.msra.mxu0 %v374
        %378 = vmatprep.subr.bf16.mxu0 0
        %379 = vmatpush1.bf16.xpose.msra.mxu0 0
        %380 = vmatprep.subr.bf16.mxu0 0
        %381 = vmatpush1.bf16.xpose.msra.mxu0 0
        %382 = vmatprep.subr.bf16.mxu0 0
        %383 = vmatpush1.bf16.xpose.msra.mxu0 0
        %384 = vmatprep.subr.bf16.mxu0 0
        %385 = vmatpush1.bf16.xpose.msra.mxu0 0
        %386 = vmatprep.subr.bf16.mxu0 0
        %387 = vmatpush1.bf16.xpose.msra.mxu0 0
        %388 = vmatprep.subr.bf16.mxu0 0
        %389 = vmatpush1.bf16.xpose.msra.mxu0 0
        %390 = vmatprep.subr.bf16.mxu0 0
        %391 = vmatpush1.bf16.xpose.msra.mxu0 0
        %392 = vmatprep.subr.bf16.mxu0 0
        %393 = vmatpush1.bf16.xpose.msra.mxu0 0
        %394 = vmatprep.subr.bf16.mxu0 0
        %395 = vmatpush1.bf16.xpose.msra.mxu0 0
        %396 = vmatprep.subr.bf16.mxu0 0
        %397 = vmatpush1.bf16.xpose.msra.mxu0 0
        %398 = vmatprep.subr.bf16.mxu0 0
        %399 = vmatpush1.bf16.xpose.msra.mxu0 0
        %400 = vmatprep.subr.bf16.mxu0 0
        %401 = vmatpush1.bf16.xpose.msra.mxu0 0
        %402 = vmatprep.subr.bf16.mxu0 0
        %403 = vmatpush1.bf16.xpose.msra.mxu0 0
        %404 = vmatprep.subr.bf16.mxu0 0
        %405 = vmatpush1.bf16.xpose.msra.mxu0 0
        %406 = vmatprep.subr.bf16.mxu0 0
        %407 = vmatpush1.bf16.xpose.msra.mxu0 0
        %408 = vmatprep.mubr.bf16.mxu0 0
        %409 = vmatmul.mubr.bf16.gmra.mrb[0].mxu0 %v371
        %v410 = vpop.f32.mrb[0].mxu0
        %v411 = vadd.f32 0.0, %v410
        %v412 = vpop.f32.mrb[0].mxu0
        %v413 = vpop.f32.mrb[0].mxu0
        %v414 = vadd.f32 0.0, %v413
        %v415 = vpop.f32.mrb[0].mxu0
        %416 = vdwg.mxu0
        %vm417 = vcmask 130048
        %v418 = vsel %vm417, %v411, -inf
        %419 = vmax.xlane.f32.xlu0 %v418
        %v420 = vpop.xlane.xlu0 %419
        %v421 = vsel %vm417, %v414, -inf
        %422 = vmax.xlane.f32.xlu0 %v421
        %v423 = vpop.xlane.xlu0 %422
        %v424 = vsub.f32 %v411, %v420
        %v425 = vsub.f32 %v414, %v423
        %v426 = vmul.f32 %v424, 1.442695
        %v427 = vpow.pop %v426
        %v428 = vmul.f32 %v425, 1.442695
        %v429 = vpow.pop %v428
        %v430 = vsel %vm417, %v427, 0.0
        %431 = vadd.xlane.f32.xlu0 %v430
        %v432 = vpop.xlane.xlu0 %431
        %v433 = vsel %vm417, %v429, 0.0
        %434 = vadd.xlane.f32.xlu0 %v433
        %v435 = vpop.xlane.xlu0 %434
        %v436 = vrcp.pop %v432
        %v437 = vrcp.pop %v435
        %v438 = vmul.f32 %v427, %v436
        %v439 = vmul.f32 %v429, %v437
        %v440 = vpack.c.bf16 %v439, %v438
        %441 = vrot.lane.b32.xlu0 %v365, 112
        %v442 = vpop.permute.xlu0 %441
        %v445 = vsel %vm417, %v440, 0
        %447 = vmatprep.subr.bf16.mxu0 0
        %448 = vmatpush1.bf16.msra.mxu0 %v442
        %449 = vmatprep.subr.bf16.mxu0 0
        %450 = vmatpush1.bf16.msra.mxu0 0
        %451 = vmatprep.subr.bf16.mxu0 0
        %452 = vmatpush1.bf16.msra.mxu0 0
        %453 = vmatprep.subr.bf16.mxu0 0
        %454 = vmatpush1.bf16.msra.mxu0 0
        %455 = vmatprep.subr.bf16.mxu0 0
        %456 = vmatpush1.bf16.msra.mxu0 0
        %457 = vmatprep.subr.bf16.mxu0 0
        %458 = vmatpush1.bf16.msra.mxu0 0
        %459 = vmatprep.subr.bf16.mxu0 0
        %460 = vmatpush1.bf16.msra.mxu0 0
        %461 = vmatprep.subr.bf16.mxu0 0
        %462 = vmatpush1.bf16.msra.mxu0 0
        %463 = vmatprep.subr.bf16.mxu0 0
        %464 = vmatpush1.bf16.msra.mxu0 0
        %465 = vmatprep.subr.bf16.mxu0 0
        %466 = vmatpush1.bf16.msra.mxu0 0
        %467 = vmatprep.subr.bf16.mxu0 0
        %468 = vmatpush1.bf16.msra.mxu0 0
        %469 = vmatprep.subr.bf16.mxu0 0
        %470 = vmatpush1.bf16.msra.mxu0 0
        %471 = vmatprep.subr.bf16.mxu0 0
        %472 = vmatpush1.bf16.msra.mxu0 0
        %473 = vmatprep.subr.bf16.mxu0 0
        %474 = vmatpush1.bf16.msra.mxu0 0
        %475 = vmatprep.subr.bf16.mxu0 0
        %476 = vmatpush1.bf16.msra.mxu0 0
        %477 = vmatprep.subr.bf16.mxu0 0
        %478 = vmatpush1.bf16.msra.mxu0 0
        %479 = vmatprep.mubr.bf16.mxu0 0
        %480 = vmatmul.mubr.bf16.gmra.mrb[0].mxu0 %v445
        %v481 = vpop.f32.mrb[0].mxu0
        %v482 = vadd.f32 0.0, %v481
        %v483 = vpop.f32.mrb[0].mxu0
        %v484 = vpop.f32.mrb[0].mxu0
        %v485 = vadd.f32 0.0, %v484
        %v486 = vpop.f32.mrb[0].mxu0
        %487 = vdwg.mxu0
        %v488 = vld [vmem:[#allocation2] sm:$0xff]
        %v489 = vld [vmem:[#allocation2 + $0x8] sm:$0xff]
        %v490 = vpack.c.bf16 %v485, %v482
        %v491 = vld [vmem:[%s285] sm:$0xf]
        %v493 = vsel %vm369, %v490, 0
        %vm495 = vcmask 1043456
        %v497 = vsel %vm495, %v491, 0
        %499 = vmatprep.subr.bf16.mxu0 0
        %500 = vmatpush1.bf16.msra.mxu0 %v497
        %501 = vmatprep.subr.bf16.mxu0 0
        %502 = vmatpush1.bf16.msra.mxu0 0
        %503 = vmatprep.subr.bf16.mxu0 0
        %504 = vmatpush1.bf16.msra.mxu0 0
        %505 = vmatprep.subr.bf16.mxu0 0
        %506 = vmatpush1.bf16.msra.mxu0 0
        %507 = vmatprep.subr.bf16.mxu0 0
        %508 = vmatpush1.bf16.msra.mxu0 0
        %509 = vmatprep.subr.bf16.mxu0 0
        %510 = vmatpush1.bf16.msra.mxu0 0
        %511 = vmatprep.subr.bf16.mxu0 0
        %512 = vmatpush1.bf16.msra.mxu0 0
        %513 = vmatprep.subr.bf16.mxu0 0
        %514 = vmatpush1.bf16.msra.mxu0 0
        %515 = vmatprep.subr.bf16.mxu0 0
        %516 = vmatpush1.bf16.msra.mxu0 0
        %517 = vmatprep.subr.bf16.mxu0 0
        %518 = vmatpush1.bf16.msra.mxu0 0
        %519 = vmatprep.subr.bf16.mxu0 0
        %520 = vmatpush1.bf16.msra.mxu0 0
        %521 = vmatprep.subr.bf16.mxu0 0
        %522 = vmatpush1.bf16.msra.mxu0 0
        %523 = vmatprep.subr.bf16.mxu0 0
        %524 = vmatpush1.bf16.msra.mxu0 0
        %525 = vmatprep.subr.bf16.mxu0 0
        %526 = vmatpush1.bf16.msra.mxu0 0
        %527 = vmatprep.subr.bf16.mxu0 0
        %528 = vmatpush1.bf16.msra.mxu0 0
        %529 = vmatprep.subr.bf16.mxu0 0
        %530 = vmatpush1.bf16.msra.mxu0 0
        %531 = vmatprep.mubr.bf16.mxu0 0
        %532 = vmatmul.mubr.bf16.gmra.mrb[0].mxu0 %v493
        %v533 = vpop.f32.mrb[0].mxu0
        %v534 = vadd.f32 0.0, %v533
        %v535 = vpop.f32.mrb[0].mxu0
        %v536 = vpop.f32.mrb[0].mxu0
        %v537 = vadd.f32 0.0, %v536
        %v538 = vpop.f32.mrb[0].mxu0
        %539 = vdwg.mxu0
        %v540 = vadd.f32 %v488, %v534
        %v541 = vadd.f32 %v489, %v537
        %542 = vst.msk [vmem:[#allocation2] sm:$0xff] %vm320, %v540
        %543 = vst.msk [vmem:[#allocation2 + $0x8] sm:$0xff] %vm320, %v541
        %p544 = scmp.eq.s32.totalorder %s24, 3
        // Predicated region
        $region45: #{attention_pallas.1} parent=39 // pred_check
          %p545 = pneg %p544
        $region46: #{attention_pallas.1} parent=39 // pred_check_branch
          %547 = sbr.rel (%p545) target = $region48
        $region47: #{attention_pallas.1} parent=39 // pred_region
          %v548 = vld [vmem:[#allocation2] sm:$0xff]
          %v549 = vld [vmem:[#allocation2 + $0x8] sm:$0xff]
          %v550 = vld [vmem:[%s4] sm:$0x1]
          %v552 = vlaneseq
          %v553 = vshrl.u32 %v552, 7
          %v554 = vsub.s32 0, %v553
          %v555 = vrot.slane %v550, %v554
          %v557 = vadd.f32 %v548, %v555
          %v558 = vadd.f32 %v549, %v555
          %559 = vst.msk [vmem:[%s268] sm:$0xff] %vm320, %v557
          %560 = vst.msk [vmem:[%s268 + $0x8] sm:$0xff] %vm320, %v558
        $region48: #{attention_pallas.1} parent=39 // pred_fallthru
          _
        %s561 = sand.u32 %s164, 1
        %s562 = scalar_lea.sflag [#allocation4], %s561
        %s563 = sand.u32 %s164, 1
        %s564 = smul.addr %s563, 16
        %s565 = scalar_lea.vmem [#allocation3], %s564
        // Predicated region
        $region49: #{attention_pallas.1} parent=39 // pred_check
          %p566 = pneg %p174
        $region50: #{attention_pallas.1} parent=39 // pred_check_branch
          %568 = sbr.rel (%p566) target = $region52
        $region51: #{attention_pallas.1} parent=39 // pred_region
          %s570 = ssub.s32 256, 256
          %571 = vsyncadd %s562, %s570
          %s572 = smul.addr %s23, 2
          %s573 = smul.addr %s572, 128
          %s574 = scalar_lea.hbm %s5, %s573
          %s575 = sshll.u32 %s565, 4
          %s576 = int_to_ptr.vmem [resolvable:$true] %s575
          %581 = dma.vmem_to_hbm [thread:$0]  %s576, 256, %s574, %s562, 128, 128, 8
        $region52: #{attention_pallas.1} parent=39 // pred_fallthru
          _
      $region40: #{attention_pallas.1} parent=5 // pred_fallthru
        _
      %p582 = scmp.le.s32.totalorder 2, %s14
      // Predicated region
      $region53: #{attention_pallas.1} parent=5 // pred_check
        %p583 = pneg %p582
      $region54: #{attention_pallas.1} parent=5 // pred_check_branch
        %585 = sbr.rel (%p583) target = $region56
      $region55: #{attention_pallas.1} parent=5 // pred_region
        %s586 = ssub.s32 %s14, 2
        // Predicated region
        $region57: #{attention_pallas.1} parent=55 // pred_check
          %p587 = pneg %p180
        $region58: #{attention_pallas.1} parent=55 // pred_check_branch
          %589 = sbr.rel (%p587) target = $region60
        $region59: #{attention_pallas.1} parent=55 // pred_region
          %s590 = sand.u32 %s165, 1
          %s591 = scalar_lea.sflag [#allocation4], %s590
          %s592 = sand.u32 %s165, 1
          %s593 = smul.addr %s592, 16
          %s594 = scalar_lea.vmem [#allocation3], %s593
          %595 = dma.done %s591, 256
        $region60: #{attention_pallas.1} parent=55 // pred_fallthru
          _
      $region56: #{attention_pallas.1} parent=5 // pred_fallthru
        _
    $region6: #{attention_pallas.1} parent=1 // loop_footer
      %s18 = sadd.s32 1, %s14
    $region7: #{attention_pallas.1} parent=1 // loop_footer_branch
      %13 = sbr.rel target = $region3
    $region8: #{attention_pallas.1} parent=1 // loop_exit
      _
    %596 = vsyncpa [#allocation4], 1
    %s597 = scalar_lea.sflag [#allocation4], 1
    %598 = vsyncpa %s597, 1

</llo_original>
